<compile_context>
chip_gen: v6e
topology: v6e:2x2x1
jax: 0.10.0
libtpu: 0.0.40
codegen_flags: <defaults>
</compile_context>

<pallas_src>
import jax
import jax.numpy as jnp
from jax.experimental import pallas as pl
from jax.experimental.pallas import tpu as pltpu


def _fused_conv_kernel(p_ref, w_ref, b_ref, o_ref):
    # p_ref: (9*C_in, HW_tile)  bf16  -- im2col taps, channel-concat contraction axis
    # w_ref: (C_out, 9*C_in)    bf16  -- VMEM-resident across the whole grid
    # b_ref: (C_out, 1)         f32
    # o_ref: (C_out, HW_tile)   out dtype (lane-dense minor dim, already NCHW)
    acc = jnp.dot(w_ref[...], p_ref[...], preferred_element_type=jnp.float32)
    o_ref[...] = (acc + b_ref[...]).astype(o_ref.dtype)


def _vmem_budget_bytes():
    """Usable per-core VMEM budget (physical minus headroom, generation-aware)."""
    try:
        phys = int(pltpu.get_tpu_info().vmem_capacity_bytes)
    except Exception:
        phys = 64 * 1024 * 1024  # conservative (v7x-sized) if the query is unavailable
    # Leave ~12 MiB for internal scratch / semaphores; never ask for more than ~112 MiB.
    return int(min(max(phys - 12 * 1024 * 1024, 32 * 1024 * 1024), 112 * 1024 * 1024))


def _pick_hw_tile(hw, k9, c_out, out_itemsize, vmem_budget, n_batch):
    """Budget-driven HW tile: ~3 MiB streaming patch block, clamped by the VMEM budget,
    rounded to a 128 multiple (ragged last tile via cdiv), >=2 grid steps when N==1."""
    # Per-output-column cost of the double-buffered streaming blocks, plus the fixed
    # cost of the (also double-buffered) weight / bias blocks.
    bytes_per_col = 2 * (k9 * 2 + c_out * out_itemsize)
    fixed = 2 * (c_out * k9 * 2 + c_out * 4)
    headroom = 4 * 1024 * 1024
    avail = max(vmem_budget - fixed - headroom, bytes_per_col * 128)
    cap_budget = max(avail // bytes_per_col, 128)

    target = max((3 * 1024 * 1024) // (k9 * 2), 128)  # ~3 MiB bf16 patch block per step
    tile = min(target, cap_budget)

    if n_batch == 1 and hw >= 256:
        tile = min(tile, -(-hw // 2))  # keep >=2 steps on a parallel axis (v7x: 2 TCs)

    if hw <= tile:
        return hw  # single full-row block ("equal to full dim" satisfies the layout rule)
    return max(128, (tile // 128) * 128)  # 128-multiple -> unmasked lane-dense stores


@jax.jit
def downsample_block(x_nchw, weight, bias):
    """Conv2d(k=3, stride=2, pad=1) matching PyTorch semantics.

    x_nchw: (N, C_in, H, W); weight: (C_out, C_in, 3, 3); bias: (C_out,)
    returns (N, C_out, H_out, W_out)
    """
    N, C_in, H, W = x_nchw.shape
    C_out = weight.shape[0]
    H_out = (H + 2 - 3) // 2 + 1
    W_out = (W + 2 - 3) // 2 + 1
    HW = H_out * W_out
    K9 = 9 * C_in

    # ---- glue: bf16 cast FIRST, then spatial pad + stride-2 tap extraction; the taps
    # are concatenated on the contraction axis, so XLA fuses cast+pad+slices+stack into
    # a single bf16 im2col write (half the bytes of the previous f32 glue). ----
    x_bf = x_nchw.astype(jnp.bfloat16)
    x_pad = jnp.pad(x_bf, ((0, 0), (0, 0), (1, 1), (1, 1)))  # (N, C_in, H+2, W+2)
    taps = []
    for kh in range(3):
        for kw in range(3):
            taps.append(
                x_pad[:, :, kh : kh + 2 * H_out - 1 : 2, kw : kw + 2 * W_out - 1 : 2]
            )  # (N, C_in, H_out, W_out)
    patches = jnp.stack(taps, axis=1).reshape(N, K9, HW)  # (kh,kw)-major, bf16

    # weight (C_out, C_in, 3, 3) -> (C_out, kh, kw, C_in) -> (C_out, 9*C_in),
    # matching the (kh, kw, C_in) ordering of the patches' contraction axis.
    w2d = jnp.transpose(weight, (0, 2, 3, 1)).reshape(C_out, K9).astype(jnp.bfloat16)
    b2d = bias.reshape(C_out, 1).astype(jnp.float32)

    out_dtype = x_nchw.dtype
    out_itemsize = jnp.dtype(out_dtype).itemsize
    vmem_budget = _vmem_budget_bytes()
    hw_tile = _pick_hw_tile(HW, K9, C_out, out_itemsize, vmem_budget, N)
    n_hw = pl.cdiv(HW, hw_tile)

    # Double-buffered blocks for every operand (weights/bias included) + headroom.
    block_bytes = 2 * (
        K9 * hw_tile * 2
        + C_out * hw_tile * out_itemsize
        + C_out * K9 * 2
        + C_out * 4
    )
    vmem_limit = int(min(max(block_bytes + 4 * 1024 * 1024, 32 * 1024 * 1024),
                         vmem_budget))

    out_flat = pl.pallas_call(
        _fused_conv_kernel,
        out_shape=jax.ShapeDtypeStruct((N, C_out, HW), out_dtype),
        grid_spec=pltpu.PrefetchScalarGridSpec(
            num_scalar_prefetch=0,
            grid=(N, n_hw),
            in_specs=[
                pl.BlockSpec((None, K9, hw_tile), lambda n, h: (n, 0, h)),
                pl.BlockSpec((C_out, K9), lambda n, h: (0, 0)),   # VMEM-resident
                pl.BlockSpec((C_out, 1), lambda n, h: (0, 0)),    # VMEM-resident
            ],
            out_specs=pl.BlockSpec((None, C_out, hw_tile), lambda n, h: (n, 0, h)),
        ),
        compiler_params=pltpu.CompilerParams(
            dimension_semantics=("parallel", "parallel"),
            vmem_limit_bytes=vmem_limit,
        ),
    )(patches, w2d, b2d)

    # already NCHW — just un-flatten the spatial dims
    return out_flat.reshape(N, C_out, H_out, W_out)


if __name__ == "__main__":
    key = jax.random.PRNGKey(0)
    k_x, k_w, k_b = jax.random.split(key, 3)

    N, C_in, H, W = 2, 4, 16, 16
    C_out = 8

    x = jax.random.normal(k_x, (N, C_in, H, W), dtype=jnp.float32)
    # deterministic synthetic parameters (PyTorch Conv2d shapes)
    weight = jax.random.normal(k_w, (C_out, C_in, 3, 3), dtype=jnp.float32) * 0.1
    bias = jax.random.normal(k_b, (C_out,), dtype=jnp.float32) * 0.1

    out = jax.block_until_ready(downsample_block(x, weight, bias))

    # reference with the same bf16 input/weight quantization, f32 accumulation
    ref_bf16 = jax.lax.conv_general_dilated(
        x.astype(jnp.bfloat16),
        weight.astype(jnp.bfloat16),
        window_strides=(2, 2),
        padding=((1, 1), (1, 1)),
        dimension_numbers=("NCHW", "OIHW", "NCHW"),
        preferred_element_type=jnp.float32,
    ) + bias.reshape(1, C_out, 1, 1)

    # full-precision reference (semantic check; looser tol for bf16 quantization)
    ref_f32 = jax.lax.conv_general_dilated(
        x,
        weight,
        window_strides=(2, 2),
        padding=((1, 1), (1, 1)),
        dimension_numbers=("NCHW", "OIHW", "NCHW"),
    ) + bias.reshape(1, C_out, 1, 1)

    assert out.shape == (N, C_out, H // 2, W // 2), out.shape
    assert jnp.allclose(out, ref_bf16.astype(out.dtype), atol=2e-3, rtol=2e-3), \
        "mismatch vs bf16 reference conv"
    assert jnp.allclose(out, ref_f32, atol=5e-2, rtol=5e-2), \
        "mismatch vs f32 reference conv"
    print("KERNEL_OK")
</pallas_src>

<mosaic_0001>
module attributes {stable_mosaic.version = 11 : i64} {
  func.func @_fused_conv_kernel(%arg0: i32, %arg1: i32, %arg2: memref<1x36x64xbf16, #tpu.memory_space<vmem>>, %arg3: memref<8x36xbf16, #tpu.memory_space<vmem>>, %arg4: memref<8x1xf32, #tpu.memory_space<vmem>>, %arg5: memref<1x8x64xf32, #tpu.memory_space<vmem>>) attributes {dimension_semantics = [#tpu.dimension_semantics<parallel>, #tpu.dimension_semantics<parallel>], iteration_bounds = array<i64: 2, 1>, scalar_prefetch = 0 : i64, scratch_operands = 0 : i64, tpu.core_type = #tpu.core_type<tc>, window_params = [{transform_indices = @transform_0, window_bounds = array<i64: 1, 36, 64>}, {pipeline_mode = #tpu.pipeline_mode<synchronous>, transform_indices = @transform_1, window_bounds = array<i64: 8, 36>}, {pipeline_mode = #tpu.pipeline_mode<synchronous>, transform_indices = @transform_2, window_bounds = array<i64: 8, 1>}, {transform_indices = @transform_3, window_bounds = array<i64: 1, 8, 64>}]} {
    %c0 = arith.constant 0 : index
    %c0_0 = arith.constant 0 : index
    %0 = vector.load %arg3[%c0, %c0_0] : memref<8x36xbf16, #tpu.memory_space<vmem>>, vector<8x36xbf16>
    %c0_1 = arith.constant 0 : index
    %c0_2 = arith.constant 0 : index
    %c0_3 = arith.constant 0 : index
    %1 = vector.load %arg2[%c0_1, %c0_2, %c0_3] : memref<1x36x64xbf16, #tpu.memory_space<vmem>>, vector<1x36x64xbf16>
    %2 = vector.shape_cast %1 : vector<1x36x64xbf16> to vector<36x64xbf16>
    %cst = arith.constant dense<0.000000e+00> : vector<8x64xf32>
    %3 = tpu.matmul %0, %2, %cst {dimension_numbers = #tpu.dot_dimension_numbers<[1], [0], [0], [1], [0, 0, 1, 1], [], []>} : vector<8x36xbf16>, vector<36x64xbf16>, vector<8x64xf32> -> vector<8x64xf32>
    %c0_4 = arith.constant 0 : index
    %c0_5 = arith.constant 0 : index
    %4 = vector.load %arg4[%c0_4, %c0_5] : memref<8x1xf32, #tpu.memory_space<vmem>>, vector<8x1xf32>
    %5 = vector.broadcast %4 : vector<8x1xf32> to vector<8x64xf32>
    %6 = arith.addf %3, %5 : vector<8x64xf32>
    %c0_6 = arith.constant 0 : index
    %c0_7 = arith.constant 0 : index
    %c0_8 = arith.constant 0 : index
    %7 = vector.load %arg5[%c0_6, %c0_7, %c0_8] : memref<1x8x64xf32, #tpu.memory_space<vmem>>, vector<1x8x64xf32>
    %8 = vector.shape_cast %7 : vector<1x8x64xf32> to vector<8x64xf32>
    %9 = vector.shape_cast %6 : vector<8x64xf32> to vector<1x8x64xf32>
    tpu.vector_store %arg5[%c0_6, %c0_7, %c0_8], %9 {strides = array<i32>} : memref<1x8x64xf32, #tpu.memory_space<vmem>>, vector<1x8x64xf32>,
    return
  }
  func.func @transform_0(%arg0: i32, %arg1: i32) -> (i32, i32, i32) {
    %c0_i32 = arith.constant 0 : i32
    %c0_i32_0 = arith.constant 0 : i32
    return %arg0, %c0_i32, %arg1 : i32, i32, i32
  }
  func.func @transform_1(%arg0: i32, %arg1: i32) -> (i32, i32) {
    %c0_i32 = arith.constant 0 : i32
    %c0_i32_0 = arith.constant 0 : i32
    %c0_i32_1 = arith.constant 0 : i32
    return %c0_i32, %c0_i32_0 : i32, i32
  }
  func.func @transform_2(%arg0: i32, %arg1: i32) -> (i32, i32) {
    %c0_i32 = arith.constant 0 : i32
    %c0_i32_0 = arith.constant 0 : i32
    %c0_i32_1 = arith.constant 0 : i32
    return %c0_i32, %c0_i32_0 : i32, i32
  }
  func.func @transform_3(%arg0: i32, %arg1: i32) -> (i32, i32, i32) {
    %c0_i32 = arith.constant 0 : i32
    %c0_i32_0 = arith.constant 0 : i32
    return %arg0, %c0_i32, %arg1 : i32, i32, i32
  }
}

</mosaic_0001>

<llo_original>
// kernel: downsample_block.1
$region0: #{downsample_block.1}
  #allocation0 [shape = 'u32[]', space=smem, size = 0x4, offset = 0x4, fixed_abs, tag = 'smem constant byte address 0x4 - core index']
  #allocation1 [shape = 'u32[144,128]{1,0:T(1,128)}', space=vmem, size = 0x12000, scoped, tag = 'internal scratch']
  %s0 = inlined_call_operand.vmem [shape: bf16[2,36,64], index: 0, kind: input, shape index: {}]
  %s1 = inlined_call_operand.vmem [shape: bf16[8,36], index: 1, kind: input, shape index: {}]
  %s2 = inlined_call_operand.vmem [shape: f32[8,1], index: 2, kind: input, shape index: {}]
  %s3 = inlined_call_operand.vmem [shape: f32[2,8,64], index: 3, kind: output, shape index: {}]
  %s4 = sld [smem:[#allocation0]]
  $region45: #{downsample_block.1} parent=0
    _
  %s6 = ssub.s32 1, %s4
  %s7 = scalar_select 0, %s6, %s4
  loop: start=0, step=1, limit=4
  $region2: #{downsample_block.1} parent=0 // loop_pre_header
    _
  $region3: #{downsample_block.1} parent=0 // loop_header
    %s9 = sphi 0, %s13
    %p10 = scmp.ge.s32.totalorder %s9, 4
    %s16 = sphi 0, %s28
    %s17 = sphi 0, %s24
    %s18 = sphi 0, %s16
    %s19 = sphi 0, %s17
    %s20 = sphi 0, %s18
    %s21 = sphi 0, %s19
    %s33 = sphi 0, %s35
    %s36 = sphi 0, %s33
    %s37 = sphi 0, %s36
    %s53 = sphi 0, %s37
    %s57 = sphi 0, %s57
    %s59 = sphi 0, %s57
    %s60 = sphi 0, %s59
    %s74 = sphi 0, %s60
    %s78 = sphi 0, %s78
    %s80 = sphi 0, %s78
    %s81 = sphi 0, %s80
    %s95 = sphi 0, %s81
    %s103 = sphi 0, %s105
    %s106 = sphi 0, %s103
    %s107 = sphi 0, %s106
    %s123 = sphi 0, %s107
  $region4: #{downsample_block.1} parent=0 // loop_header_branch
    %12 = sbr.rel (%p10) target = $region8
  $region5: #{downsample_block.1} parent=0 // loop_body
    %s14 = ssub.s32 %s9, 1
    %s15 = ssub.s32 %s9, 2
    %s22 = sadd.s32 1, %s17
    %p23 = scmp.ge.s32.totalorder %s22, 1
    %s24 = scalar_select %p23, 0, %s22
    %s25 = sadd.s32 1, %s16
    %s26 = scalar_select %p23, %s25, %s16
    %p27 = scmp.ge.s32.totalorder %s26, 2
    %s28 = scalar_select %p27, 0, %s26
    %s29 = ssub.s32 %s16, %s28
    %s30 = ssub.s32 %s17, %s24
    %s31 = sor.u32 %s29, %s30
    %p32 = scmp.eq.s32.totalorder %s31, 0
    %s34 = sadd.s32 %s33, 1
    %s35 = scalar_select %p32, %s33, %s34
    %p38 = pneg %p32
    %p39 = scmp.eq.s32.totalorder %s9, 1
    %p40 = por %p38, %p39
    %p41 = scmp.ne.s32.totalorder %s33, %s36
    %p42 = scmp.eq.s32.totalorder %s9, 0
    %p43 = por %p41, %p42
    %p44 = scmp.ne.s32.totalorder %s33, %s36
    %p45 = scmp.eq.s32.totalorder %s14, 1
    %p46 = por %p44, %p45
    %p47 = scmp.ne.s32.totalorder %s36, %s37
    %p48 = scmp.eq.s32.totalorder %s14, 0
    %p49 = por %p47, %p48
    %p50 = scmp.ne.s32.totalorder %s36, %s37
    %p51 = scmp.eq.s32.totalorder %s15, 1
    %p52 = por %p50, %p51
    %p54 = scmp.ne.s32.totalorder %s37, %s53
    %p55 = scmp.eq.s32.totalorder %s15, 0
    %p56 = por %p54, %p55
    %s58 = sadd.s32 %s57, 1
    %p61 = scmp.eq.s32.totalorder %s9, 1
    %p62 = scmp.ne.s32.totalorder %s57, %s59
    %p63 = scmp.eq.s32.totalorder %s9, 0
    %p64 = por %p62, %p63
    %p65 = scmp.ne.s32.totalorder %s57, %s59
    %p66 = scmp.eq.s32.totalorder %s14, 1
    %p67 = por %p65, %p66
    %p68 = scmp.ne.s32.totalorder %s59, %s60
    %p69 = scmp.eq.s32.totalorder %s14, 0
    %p70 = por %p68, %p69
    %p71 = scmp.ne.s32.totalorder %s59, %s60
    %p72 = scmp.eq.s32.totalorder %s15, 1
    %p73 = por %p71, %p72
    %p75 = scmp.ne.s32.totalorder %s60, %s74
    %p76 = scmp.eq.s32.totalorder %s15, 0
    %p77 = por %p75, %p76
    %s79 = sadd.s32 %s78, 1
    %p82 = scmp.eq.s32.totalorder %s9, 1
    %p83 = scmp.ne.s32.totalorder %s78, %s80
    %p84 = scmp.eq.s32.totalorder %s9, 0
    %p85 = por %p83, %p84
    %p86 = scmp.ne.s32.totalorder %s78, %s80
    %p87 = scmp.eq.s32.totalorder %s14, 1
    %p88 = por %p86, %p87
    %p89 = scmp.ne.s32.totalorder %s80, %s81
    %p90 = scmp.eq.s32.totalorder %s14, 0
    %p91 = por %p89, %p90
    %p92 = scmp.ne.s32.totalorder %s80, %s81
    %p93 = scmp.eq.s32.totalorder %s15, 1
    %p94 = por %p92, %p93
    %p96 = scmp.ne.s32.totalorder %s81, %s95
    %p97 = scmp.eq.s32.totalorder %s15, 0
    %p98 = por %p96, %p97
    %s99 = ssub.s32 %s16, %s28
    %s100 = ssub.s32 %s17, %s24
    %s101 = sor.u32 %s99, %s100
    %p102 = scmp.eq.s32.totalorder %s101, 0
    %s104 = sadd.s32 %s103, 1
    %s105 = scalar_select %p102, %s103, %s104
    %p108 = pneg %p102
    %p109 = scmp.eq.s32.totalorder %s9, 1
    %p110 = por %p108, %p109
    %p111 = scmp.ne.s32.totalorder %s103, %s106
    %p112 = scmp.eq.s32.totalorder %s9, 0
    %p113 = por %p111, %p112
    %p114 = scmp.ne.s32.totalorder %s103, %s106
    %p115 = scmp.eq.s32.totalorder %s14, 1
    %p116 = por %p114, %p115
    %p117 = scmp.ne.s32.totalorder %s106, %s107
    %p118 = scmp.eq.s32.totalorder %s14, 0
    %p119 = por %p117, %p118
    %p120 = scmp.ne.s32.totalorder %s106, %s107
    %p121 = scmp.eq.s32.totalorder %s15, 1
    %p122 = por %p120, %p121
    %p124 = scmp.ne.s32.totalorder %s107, %s123
    %p125 = scmp.eq.s32.totalorder %s15, 0
    %p126 = por %p124, %p125
    %p127 = scmp.le.s32.totalorder 1, %s9
    %p128 = scmp.lt.s32.totalorder %s9, 3
    %p129 = pnand %p127, %p128
    %p130 = pneg %p129
    // Predicated region
    $region9: #{downsample_block.1} parent=5 // pred_check
      _
    $region10: #{downsample_block.1} parent=5 // pred_check_branch
      %132 = sbr.rel (%p129) target = $region12
    $region11: #{downsample_block.1} parent=5 // pred_region
      %s133 = ssub.s32 %s9, 1
      // Predicated region
      $region13: #{downsample_block.1} parent=11 // pred_check
        %p134 = pneg %p70
      $region14: #{downsample_block.1} parent=11 // pred_check_branch
        %136 = sbr.rel (%p134) target = $region16
      $region15: #{downsample_block.1} parent=11 // pred_region
        _
      $region16: #{downsample_block.1} parent=11 // pred_fallthru
        _
      // Predicated region
      $region17: #{downsample_block.1} parent=11 // pred_check
        %p137 = pneg %p91
      $region18: #{downsample_block.1} parent=11 // pred_check_branch
        %139 = sbr.rel (%p137) target = $region20
      $region19: #{downsample_block.1} parent=11 // pred_region
        _
      $region20: #{downsample_block.1} parent=11 // pred_fallthru
        _
    $region12: #{downsample_block.1} parent=5 // pred_fallthru
      _
    %p140 = scmp.lt.s32.totalorder %s9, 2
    // Predicated region
    $region21: #{downsample_block.1} parent=5 // pred_check
      %p141 = pneg %p140
    $region22: #{downsample_block.1} parent=5 // pred_check_branch
      %143 = sbr.rel (%p141) target = $region24
    $region23: #{downsample_block.1} parent=5 // pred_region
      // Predicated region
      $region25: #{downsample_block.1} parent=23 // pred_check
        %p144 = pneg %p43
      $region26: #{downsample_block.1} parent=23 // pred_check_branch
        %146 = sbr.rel (%p144) target = $region28
      $region27: #{downsample_block.1} parent=23 // pred_region
        %p147 = scmp.lt.s32.totalorder %s16, 1
        %s148 = scalar_select %p147, %s16, 1
        %p149 = scmp.lt.s32.totalorder %s17, 0
        %s150 = scalar_select %p149, %s17, 0
        %s151 = smul.addr %s148, 5
        %s152 = sadd.s32 %s150, %s151
        %s153 = smul.addr %s152, 4
        %s154 = scalar_lea.vmem %s0, %s153
      $region28: #{downsample_block.1} parent=23 // pred_fallthru
        _
    $region24: #{downsample_block.1} parent=5 // pred_fallthru
      _
    %p155 = scmp.le.s32.totalorder 1, %s9
    %p156 = scmp.lt.s32.totalorder %s9, 3
    %p157 = pnand %p155, %p156
    %p158 = pneg %p157
    // Predicated region
    $region29: #{downsample_block.1} parent=5 // pred_check
      _
    $region30: #{downsample_block.1} parent=5 // pred_check_branch
      %160 = sbr.rel (%p157) target = $region32
    $region31: #{downsample_block.1} parent=5 // pred_region
      %s161 = ssub.s32 %s9, 1
      %p162 = scmp.lt.s32.totalorder %s18, 1
      %s163 = scalar_select %p162, %s18, 1
      %p164 = scmp.lt.s32.totalorder %s19, 0
      %s165 = scalar_select %p164, %s19, 0
      %s166 = smul.addr %s163, 5
      %s167 = sadd.s32 %s165, %s166
      %s168 = smul.addr %s167, 4
      %s169 = scalar_lea.vmem %s0, %s168
      %p170 = pneg %p49
      %p171 = pneg %p46
      %p172 = pneg %p70
      %p173 = pneg %p67
      %p174 = pneg %p91
      %p175 = pneg %p88
      %p176 = pneg %p119
      %p177 = pneg %p116
      %p178 = scmp.lt.s32.totalorder %s18, 1
      %s179 = scalar_select %p178, %s18, 1
      %p180 = scmp.lt.s32.totalorder %s19, 0
      %s181 = scalar_select %p180, %s19, 0
      %s182 = sadd.s32 %s181, %s179
      %s183 = smul.addr %s182, 8
      %s184 = scalar_lea.vmem %s3, %s183
      %p185 = scmp.lt.s32.totalorder %s18, 1
      %s186 = scalar_select %p185, %s18, 1
      %p187 = scmp.lt.s32.totalorder %s19, 0
      %s188 = scalar_select %p187, %s19, 0
      %s189 = smul.addr %s186, 5
      %s190 = sadd.s32 %s188, %s189
      %s191 = smul.addr %s190, 4
      %s192 = scalar_lea.vmem %s0, %s191
      %p193 = scmp.lt.s32.totalorder %s18, 1
      %s194 = scalar_select %p193, %s18, 1
      %p195 = scmp.lt.s32.totalorder %s19, 0
      %s196 = scalar_select %p195, %s19, 0
      %s197 = sadd.s32 %s196, %s194
      %s198 = smul.addr %s197, 8
      %s199 = scalar_lea.vmem %s3, %s198
      %v201 = vld [vmem:[%s1] sm:$0xf]
      %v202 = vld [vmem:[%s192] sm:$0xf]
      %v203 = vld [vmem:[%s192 + $0x4] sm:$0xf]
      %v204 = vld [vmem:[%s192 + $0x8] sm:$0xf]
      %v205 = vld [vmem:[%s192 + $0xc] sm:$0xf]
      %v206 = vld [vmem:[%s192 + $0x10] sm:$0x3]
      %v207 = vld [vmem:[%s2] sm:$0xff]
      %209 = vset.pattern.permute.xlu0 0
      %210 = vperm.xlu0 %209, %v207
      %v211 = vpop.permute.xlu0 %210
      %v218 = vunpack.c.l.b16 %v202
      %v219 = vunpack.c.l.b16 %v203
      %v220 = vunpack.c.l.b16 %v204
      %v221 = vunpack.c.l.b16 %v205
      %v222 = vunpack.c.l.b16 %v206
      %v223 = vpack.c.b16 %v219, %v218
      %v224 = vpack.c.b16 %v221, %v220
      %v225 = vpack.c.b16 %v222, %v222
      %vm228 = vcmask 293888
      %v230 = vsel %vm228, %v201, 0
      %vm232 = vcmask 1041408
      %v234 = vsel %vm232, %v225, 0
      %236 = vmatprep.subr.bf16.mxu0 0
      %237 = vmatpush1.bf16.msra.mxu0 0
      %238 = vmatprep.subr.bf16.mxu0 0
      %239 = vmatpush1.bf16.msra.mxu0 0
      %240 = vmatprep.subr.bf16.mxu0 0
      %241 = vmatpush1.bf16.msra.mxu0 0
      %242 = vmatprep.subr.bf16.mxu0 0
      %243 = vmatpush1.bf16.msra.mxu0 0
      %244 = vmatprep.subr.bf16.mxu0 0
      %245 = vmatpush1.bf16.msra.mxu0 0
      %246 = vmatprep.subr.bf16.mxu0 0
      %247 = vmatpush1.bf16.msra.mxu0 %v234
      %248 = vmatprep.subr.bf16.mxu0 0
      %249 = vmatpush1.bf16.msra.mxu0 %v224
      %250 = vmatprep.subr.bf16.mxu0 0
      %251 = vmatpush1.bf16.msra.mxu0 %v223
      %252 = vmatprep.subr.bf16.mxu0 0
      %253 = vmatpush2.bf16.msra.mxu0 0
      %254 = vmatprep.subr.bf16.mxu0 0
      %255 = vmatpush2.bf16.msra.mxu0 0
      %256 = vmatprep.subr.bf16.mxu0 0
      %257 = vmatpush2.bf16.msra.mxu0 0
      %258 = vmatprep.subr.bf16.mxu0 0
      %259 = vmatpush2.bf16.msra.mxu0 0
      %260 = vmatprep.subr.bf16.mxu0 0
      %261 = vmatpush2.bf16.msra.mxu0 0
      %262 = vmatprep.subr.bf16.mxu0 0
      %263 = vmatpush2.bf16.msra.mxu0 0
      %264 = vmatprep.subr.bf16.mxu0 0
      %265 = vmatpush2.bf16.msra.mxu0 0
      %266 = vmatprep.subr.bf16.mxu0 0
      %267 = vmatpush2.bf16.msra.mxu0 0
      %268 = vmatprep.mubr.bf16.mxu0 0
      %269 = vmatmul.mubr.bf16.gmra.mxu0 %v230
      %v270 = vpop.f32.mrf.mxu0
      %v271 = vadd.f32 %v211, %v270
      %v272 = vpop.f32.mrf.mxu0
      %v273 = vpop.f32.mrf.mxu0
      %v274 = vpop.f32.mrf.mxu0
      %275 = vdwg.mxu0
      %vm276 = vcmask 523264
      %277 = vst.msk [vmem:[%s199] sm:$0xff] %vm276, %v271
      %p278 = scmp.lt.s32.totalorder %s18, 1
      %s279 = scalar_select %p278, %s18, 1
      %p280 = scmp.lt.s32.totalorder %s19, 0
      %s281 = scalar_select %p280, %s19, 0
      %s282 = sadd.s32 %s281, %s279
      %s283 = smul.addr %s282, 8
      %s284 = scalar_lea.vmem %s3, %s283
      // Predicated region
      $region33: #{downsample_block.1} parent=31 // pred_check
        %p285 = pneg %p116
      $region34: #{downsample_block.1} parent=31 // pred_check_branch
        %287 = sbr.rel (%p285) target = $region36
      $region35: #{downsample_block.1} parent=31 // pred_region
        _
      $region36: #{downsample_block.1} parent=31 // pred_fallthru
        _
    $region32: #{downsample_block.1} parent=5 // pred_fallthru
      _
    %p288 = scmp.le.s32.totalorder 2, %s9
    // Predicated region
    $region37: #{downsample_block.1} parent=5 // pred_check
      %p289 = pneg %p288
    $region38: #{downsample_block.1} parent=5 // pred_check_branch
      %291 = sbr.rel (%p289) target = $region40
    $region39: #{downsample_block.1} parent=5 // pred_region
      %s292 = ssub.s32 %s9, 2
      // Predicated region
      $region41: #{downsample_block.1} parent=39 // pred_check
        %p293 = pneg %p122
      $region42: #{downsample_block.1} parent=39 // pred_check_branch
        %295 = sbr.rel (%p293) target = $region44
      $region43: #{downsample_block.1} parent=39 // pred_region
        %p296 = scmp.lt.s32.totalorder %s20, 1
        %s297 = scalar_select %p296, %s20, 1
        %p298 = scmp.lt.s32.totalorder %s21, 0
        %s299 = scalar_select %p298, %s21, 0
        %s300 = sadd.s32 %s299, %s297
        %s301 = smul.addr %s300, 8
        %s302 = scalar_lea.vmem %s3, %s301
      $region44: #{downsample_block.1} parent=39 // pred_fallthru
        _
    $region40: #{downsample_block.1} parent=5 // pred_fallthru
      _
  $region6: #{downsample_block.1} parent=0 // loop_footer
    %s13 = sadd.s32 1, %s9
  $region7: #{downsample_block.1} parent=0 // loop_footer_branch
    %8 = sbr.rel target = $region3
  $region8: #{downsample_block.1} parent=0 // loop_exit
    _

</llo_original>
